<compile_context>
chip_gen: v7x
topology: tpu7x:2x2x1
jax: 0.10.0
libtpu: 0.0.40
codegen_flags: <defaults>
</compile_context>

<pallas_src>
import math

import jax
import jax.numpy as jnp
from jax.experimental import pallas as pl
from jax.experimental.pallas import tpu as pltpu


# ----------------------------- Pallas kernel ----------------------------------

def _make_residual_kernel(fn_tile, n_params):
    """Build a kernel computing  o = fn_tile(x, *params) + x  on one VMEM tile."""
    def kernel(*refs):
        x_ref = refs[0]
        param_refs = refs[1:1 + n_params]
        o_ref = refs[1 + n_params]
        x = x_ref[...]                                    # (row_tile, D) in VMEM
        y = fn_tile(x, *[r[...] for r in param_refs])     # fn evaluated in VMEM
        o_ref[...] = (y + x).astype(o_ref.dtype)          # fused residual add
    return kernel


# ------------------------------- wrapper ---------------------------------------

def residual_apply(fn_tile, x, params=(), *, row_tile=None):
    """Residual.forward: fn(x) + x, fused into a single pallas_call.

    x:        (..., D) — leading dims are flattened to rows (sublane axis),
              D sits on the 128-lane axis (use a multiple of 128 for real sizes).
    fn_tile:  JAX-traceable function (x_tile, *params) -> same-shape tile.
              When row_tile < total rows it must be row-wise independent
              (elementwise ops, per-row MLP / feed-forward, etc.).
    params:   tuple of jnp arrays, passed whole to every grid step (kept
              resident in VMEM since their index_map is constant).
    row_tile: rows per grid step (multiple of 8). Default: all rows in one tile.
              For production sizes pick the largest tile that fits VMEM.
    """
    orig_shape = x.shape
    D = orig_shape[-1]
    R = math.prod(orig_shape[:-1])
    x2 = x.reshape(R, D)

    if row_tile is None:
        row_tile = R
    assert R % row_tile == 0, (R, row_tile)

    in_specs = [pl.BlockSpec((row_tile, D), lambda i: (i, 0))]
    for p in params:
        in_specs.append(pl.BlockSpec(p.shape, lambda i, nd=p.ndim: (0,) * nd))

    out = pl.pallas_call(
        _make_residual_kernel(fn_tile, len(params)),
        out_shape=jax.ShapeDtypeStruct((R, D), x.dtype),
        grid=(R // row_tile,),
        in_specs=in_specs,
        out_specs=pl.BlockSpec((row_tile, D), lambda i: (i, 0)),
        compiler_params=pltpu.CompilerParams(
            dimension_semantics=("parallel",)),   # v7x: shard row tiles across 2 TCs
    )(x2, *params)
    return out.reshape(orig_shape)


# --------------------- example `fn`s wrapped by Residual -----------------------

def feedforward_tile(x, w1, b1, w2, b2):
    """fn(x) = GELU(x @ W1 + b1) @ W2 + b2   (typical Residual(FeedForward))."""
    h = jnp.dot(x, w1, preferred_element_type=jnp.float32) + b1   # MXU, f32 acc
    h = jax.nn.gelu(h)                                            # EUP/VPU
    y = jnp.dot(h.astype(w2.dtype), w2,
                preferred_element_type=jnp.float32) + b2          # MXU, f32 acc
    return y.astype(x.dtype)


def tanh_tile(x):
    """A parameterless elementwise fn, to show the combinator is generic."""
    return jnp.tanh(x)


# ----------------------------------- main --------------------------------------

if __name__ == "__main__":
    # Residual is shape-agnostic; pick small, lane-dense shapes:
    # batch=2, seq=8, hidden=128 (hidden on the 128-lane axis), ff hidden=256.
    B, S, D, HID = 2, 8, 128, 256

    key = jax.random.PRNGKey(0)
    kx, k1, k2, k3, k4 = jax.random.split(key, 5)
    x = jax.random.normal(kx, (B, S, D), jnp.float32)
    w1 = jax.random.normal(k1, (D, HID), jnp.float32) / math.sqrt(D)
    b1 = 0.1 * jax.random.normal(k2, (1, HID), jnp.float32)
    b2_key = k4
    w2 = jax.random.normal(k3, (HID, D), jnp.float32) / math.sqrt(HID)
    b2 = 0.1 * jax.random.normal(b2_key, (1, D), jnp.float32)

    # --- Residual(FeedForward): fn(x) + x, fused in one Pallas call -----------
    out_ff = residual_apply(feedforward_tile, x, (w1, b1, w2, b2), row_tile=8)
    out_ff = jax.block_until_ready(out_ff)

    ref_ff = feedforward_tile(x.reshape(-1, D), w1, b1, w2, b2).reshape(x.shape) + x
    assert out_ff.shape == x.shape, out_ff.shape
    assert jnp.allclose(out_ff, ref_ff, atol=1e-4, rtol=1e-4), \
        f"max abs err {jnp.max(jnp.abs(out_ff - ref_ff))}"

    # --- Residual(elementwise fn): tanh(x) + x ---------------------------------
    out_t = jax.block_until_ready(residual_apply(tanh_tile, x, row_tile=8))
    ref_t = jnp.tanh(x) + x
    assert jnp.allclose(out_t, ref_t, atol=1e-5, rtol=1e-5), \
        f"max abs err {jnp.max(jnp.abs(out_t - ref_t))}"

    print("KERNEL_OK")
</pallas_src>

<mosaic_0001>
module attributes {stable_mosaic.version = 11 : i64} {
  func.func @kernel(%arg0: i32, %arg1: memref<8x128xf32, #tpu.memory_space<vmem>>, %arg2: memref<128x256xf32, #tpu.memory_space<vmem>>, %arg3: memref<1x256xf32, #tpu.memory_space<vmem>>, %arg4: memref<256x128xf32, #tpu.memory_space<vmem>>, %arg5: memref<1x128xf32, #tpu.memory_space<vmem>>, %arg6: memref<8x128xf32, #tpu.memory_space<vmem>>) attributes {dimension_semantics = [#tpu.dimension_semantics<parallel>], iteration_bounds = array<i64: 2>, scalar_prefetch = 0 : i64, scratch_operands = 0 : i64, tpu.core_type = #tpu.core_type<tc>, window_params = [{transform_indices = @transform_0, window_bounds = array<i64: 8, 128>}, {pipeline_mode = #tpu.pipeline_mode<synchronous>, transform_indices = @transform_1, window_bounds = array<i64: 128, 256>}, {pipeline_mode = #tpu.pipeline_mode<synchronous>, transform_indices = @transform_2, window_bounds = array<i64: 1, 256>}, {pipeline_mode = #tpu.pipeline_mode<synchronous>, transform_indices = @transform_3, window_bounds = array<i64: 256, 128>}, {pipeline_mode = #tpu.pipeline_mode<synchronous>, transform_indices = @transform_4, window_bounds = array<i64: 1, 128>}, {transform_indices = @transform_5, window_bounds = array<i64: 8, 128>}]} {
    %c0 = arith.constant 0 : index
    %c0_0 = arith.constant 0 : index
    %0 = vector.load %arg1[%c0, %c0_0] : memref<8x128xf32, #tpu.memory_space<vmem>>, vector<8x128xf32>
    %c0_1 = arith.constant 0 : index
    %c0_2 = arith.constant 0 : index
    %1 = vector.load %arg2[%c0_1, %c0_2] : memref<128x256xf32, #tpu.memory_space<vmem>>, vector<128x256xf32>
    %c0_3 = arith.constant 0 : index
    %c0_4 = arith.constant 0 : index
    %2 = vector.load %arg3[%c0_3, %c0_4] : memref<1x256xf32, #tpu.memory_space<vmem>>, vector<1x256xf32>
    %c0_5 = arith.constant 0 : index
    %c0_6 = arith.constant 0 : index
    %3 = vector.load %arg4[%c0_5, %c0_6] : memref<256x128xf32, #tpu.memory_space<vmem>>, vector<256x128xf32>
    %c0_7 = arith.constant 0 : index
    %c0_8 = arith.constant 0 : index
    %4 = vector.load %arg5[%c0_7, %c0_8] : memref<1x128xf32, #tpu.memory_space<vmem>>, vector<1x128xf32>
    %cst = arith.constant dense<0.000000e+00> : vector<8x256xf32>
    %5 = tpu.matmul %0, %1, %cst {dimension_numbers = #tpu.dot_dimension_numbers<[1], [0], [0], [1], [0, 0, 1, 1], [], []>} : vector<8x128xf32>, vector<128x256xf32>, vector<8x256xf32> -> vector<8x256xf32>
    %6 = vector.broadcast %2 : vector<1x256xf32> to vector<8x256xf32>
    %7 = arith.addf %5, %6 : vector<8x256xf32>
    %8 = arith.mulf %7, %7 : vector<8x256xf32>
    %9 = arith.mulf %7, %8 : vector<8x256xf32>
    %cst_9 = arith.constant 4.471500e-02 : f32
    %10 = vector.broadcast %cst_9 : f32 to vector<8x256xf32>
    %11 = arith.mulf %10, %9 : vector<8x256xf32>
    %12 = arith.addf %7, %11 : vector<8x256xf32>
    %cst_10 = arith.constant 0.797884583 : f32
    %13 = vector.broadcast %cst_10 : f32 to vector<8x256xf32>
    %14 = arith.mulf %13, %12 : vector<8x256xf32>
    %15 = math.tanh %14 : vector<8x256xf32>
    %cst_11 = arith.constant 1.000000e+00 : f32
    %16 = vector.broadcast %cst_11 : f32 to vector<8x256xf32>
    %17 = arith.addf %16, %15 : vector<8x256xf32>
    %cst_12 = arith.constant 5.000000e-01 : f32
    %18 = vector.broadcast %cst_12 : f32 to vector<8x256xf32>
    %19 = arith.mulf %18, %17 : vector<8x256xf32>
    %20 = arith.mulf %7, %19 : vector<8x256xf32>
    %cst_13 = arith.constant dense<0.000000e+00> : vector<8x128xf32>
    %21 = tpu.matmul %20, %3, %cst_13 {dimension_numbers = #tpu.dot_dimension_numbers<[1], [0], [0], [1], [0, 0, 1, 1], [], []>} : vector<8x256xf32>, vector<256x128xf32>, vector<8x128xf32> -> vector<8x128xf32>
    %22 = vector.broadcast %4 : vector<1x128xf32> to vector<8x128xf32>
    %23 = arith.addf %21, %22 : vector<8x128xf32>
    %24 = arith.addf %23, %0 : vector<8x128xf32>
    %c0_14 = arith.constant 0 : index
    %c0_15 = arith.constant 0 : index
    %25 = vector.load %arg6[%c0_14, %c0_15] : memref<8x128xf32, #tpu.memory_space<vmem>>, vector<8x128xf32>
    tpu.vector_store %arg6[%c0_14, %c0_15], %24 {strides = array<i32>} : memref<8x128xf32, #tpu.memory_space<vmem>>, vector<8x128xf32>,
    return
  }
  func.func @transform_0(%arg0: i32) -> (i32, i32) {
    %c0_i32 = arith.constant 0 : i32
    %c0_i32_0 = arith.constant 0 : i32
    return %arg0, %c0_i32 : i32, i32
  }
  func.func @transform_1(%arg0: i32) -> (i32, i32) {
    %c0_i32 = arith.constant 0 : i32
    %c0_i32_0 = arith.constant 0 : i32
    %c0_i32_1 = arith.constant 0 : i32
    return %c0_i32, %c0_i32_0 : i32, i32
  }
  func.func @transform_2(%arg0: i32) -> (i32, i32) {
    %c0_i32 = arith.constant 0 : i32
    %c0_i32_0 = arith.constant 0 : i32
    %c0_i32_1 = arith.constant 0 : i32
    return %c0_i32, %c0_i32_0 : i32, i32
  }
  func.func @transform_3(%arg0: i32) -> (i32, i32) {
    %c0_i32 = arith.constant 0 : i32
    %c0_i32_0 = arith.constant 0 : i32
    %c0_i32_1 = arith.constant 0 : i32
    return %c0_i32, %c0_i32_0 : i32, i32
  }
  func.func @transform_4(%arg0: i32) -> (i32, i32) {
    %c0_i32 = arith.constant 0 : i32
    %c0_i32_0 = arith.constant 0 : i32
    %c0_i32_1 = arith.constant 0 : i32
    return %c0_i32, %c0_i32_0 : i32, i32
  }
  func.func @transform_5(%arg0: i32) -> (i32, i32) {
    %c0_i32 = arith.constant 0 : i32
    %c0_i32_0 = arith.constant 0 : i32
    return %arg0, %c0_i32 : i32, i32
  }
}

</mosaic_0001>

<llo_original>
// kernel: tpu_custom_call.1
$region0: #{tpu_custom_call.1}
  #allocation0 [shape = 'u32[]', space=smem, size = 0x4, offset = 0x4, fixed_abs, tag = 'smem constant byte address 0x4 - core index']
  #allocation1 [shape = 'u32[144,128]{1,0:T(1,128)}', space=vmem, size = 0x12000, scoped, tag = 'internal scratch']
  %s0 = inlined_call_operand.hbm [shape: f32[16,128], index: 0, kind: input, shape index: {}]
  %s1 = inlined_call_operand.hbm [shape: f32[128,256], index: 1, kind: input, shape index: {}]
  %s2 = inlined_call_operand.vmem [shape: f32[1,256], index: 2, kind: input, shape index: {}]
  %s3 = inlined_call_operand.hbm [shape: f32[256,128], index: 3, kind: input, shape index: {}]
  %s4 = inlined_call_operand.vmem [shape: f32[1,128], index: 4, kind: input, shape index: {}]
  %s5 = inlined_call_operand.hbm [shape: f32[16,128], index: 5, kind: output, shape index: {}]
  %s6 = sld [smem:[#allocation0]]
  $region65: #{tpu_custom_call.1} parent=0
    _
  %s8 = ssub.s32 1, %s6
  %s9 = scalar_select 0, %s8, %s6
  $region1: #{tpu_custom_call.1} parent=0
    #allocation2 [shape = 'u8[8192]{0}', space=vmem, size = 0x2000, scoped, tag = 'input window, operand 0']
    #allocation3 [shape = 's32[2]{0}', space=sflag, size = 0x8, scoped, tag = 'scoped memory for tpu_custom_call.1']
    #allocation4 [shape = 's32[2]{0}', space=sflag, size = 0x8, scoped, tag = 'scoped memory for tpu_custom_call.1']
    #allocation5 [shape = 'u8[131072]{0}', space=vmem, size = 0x20000, scoped, tag = 'input window, operand 1, single buffered']
    #allocation6 [shape = 's32[1]{0}', space=sflag, size = 0x4, scoped, tag = 'scoped memory for tpu_custom_call.1']
    #allocation7 [shape = 'u8[131072]{0}', space=vmem, size = 0x20000, scoped, tag = 'input window, operand 3, single buffered']
    #allocation8 [shape = 'u8[8192]{0}', space=vmem, size = 0x2000, scoped, tag = 'output window, operand 0']
    %10 = vsyncpa [#allocation3], 0
    %s11 = scalar_lea.sflag [#allocation3], 1
    %12 = vsyncpa %s11, 0
    %13 = vsyncpa [#allocation6], 0
    %14 = vsyncpa [#allocation4], 0
    %s15 = scalar_lea.sflag [#allocation4], 1
    %16 = vsyncpa %s15, 0
    loop: start=0, step=1, limit=4
    $region2: #{tpu_custom_call.1} parent=1 // loop_pre_header
      _
    $region3: #{tpu_custom_call.1} parent=1 // loop_header
      %s18 = sphi 0, %s22
      %p19 = scmp.ge.s32.totalorder %s18, 4
      %s28 = sphi 0, %s30
      %s31 = sphi 0, %s28
      %s32 = sphi 0, %s31
      %s48 = sphi 0, %s32
      %s52 = sphi 0, %s52
      %s54 = sphi 0, %s52
      %s55 = sphi 0, %s54
      %s69 = sphi 0, %s55
      %s73 = sphi 0, %s73
      %s75 = sphi 0, %s73
      %s76 = sphi 0, %s75
      %s90 = sphi 0, %s76
      %s94 = sphi 0, %s94
      %s96 = sphi 0, %s94
      %s97 = sphi 0, %s96
      %s111 = sphi 0, %s97
      %s115 = sphi 0, %s115
      %s117 = sphi 0, %s115
      %s118 = sphi 0, %s117
      %s132 = sphi 0, %s118
      %s138 = sphi 0, %s140
      %s141 = sphi 0, %s138
      %s142 = sphi 0, %s141
      %s158 = sphi 0, %s142
    $region4: #{tpu_custom_call.1} parent=1 // loop_header_branch
      %21 = sbr.rel (%p19) target = $region8
    $region5: #{tpu_custom_call.1} parent=1 // loop_body
      %s23 = ssub.s32 %s18, 1
      %s24 = ssub.s32 %s18, 2
      %s25 = sadd.s32 %s18, 1
      %s26 = ssub.s32 %s18, %s25
      %p27 = scmp.eq.s32.totalorder %s26, 0
      %s29 = sadd.s32 %s28, 1
      %s30 = scalar_select %p27, %s28, %s29
      %p33 = pneg %p27
      %p34 = scmp.eq.s32.totalorder %s18, 1
      %p35 = por %p33, %p34
      %p36 = scmp.ne.s32.totalorder %s28, %s31
      %p37 = scmp.eq.s32.totalorder %s18, 0
      %p38 = por %p36, %p37
      %p39 = scmp.ne.s32.totalorder %s28, %s31
      %p40 = scmp.eq.s32.totalorder %s23, 1
      %p41 = por %p39, %p40
      %p42 = scmp.ne.s32.totalorder %s31, %s32
      %p43 = scmp.eq.s32.totalorder %s23, 0
      %p44 = por %p42, %p43
      %p45 = scmp.ne.s32.totalorder %s31, %s32
      %p46 = scmp.eq.s32.totalorder %s24, 1
      %p47 = por %p45, %p46
      %p49 = scmp.ne.s32.totalorder %s32, %s48
      %p50 = scmp.eq.s32.totalorder %s24, 0
      %p51 = por %p49, %p50
      %s53 = sadd.s32 %s52, 1
      %p56 = scmp.eq.s32.totalorder %s18, 1
      %p57 = scmp.ne.s32.totalorder %s52, %s54
      %p58 = scmp.eq.s32.totalorder %s18, 0
      %p59 = por %p57, %p58
      %p60 = scmp.ne.s32.totalorder %s52, %s54
      %p61 = scmp.eq.s32.totalorder %s23, 1
      %p62 = por %p60, %p61
      %p63 = scmp.ne.s32.totalorder %s54, %s55
      %p64 = scmp.eq.s32.totalorder %s23, 0
      %p65 = por %p63, %p64
      %p66 = scmp.ne.s32.totalorder %s54, %s55
      %p67 = scmp.eq.s32.totalorder %s24, 1
      %p68 = por %p66, %p67
      %p70 = scmp.ne.s32.totalorder %s55, %s69
      %p71 = scmp.eq.s32.totalorder %s24, 0
      %p72 = por %p70, %p71
      %s74 = sadd.s32 %s73, 1
      %p77 = scmp.eq.s32.totalorder %s18, 1
      %p78 = scmp.ne.s32.totalorder %s73, %s75
      %p79 = scmp.eq.s32.totalorder %s18, 0
      %p80 = por %p78, %p79
      %p81 = scmp.ne.s32.totalorder %s73, %s75
      %p82 = scmp.eq.s32.totalorder %s23, 1
      %p83 = por %p81, %p82
      %p84 = scmp.ne.s32.totalorder %s75, %s76
      %p85 = scmp.eq.s32.totalorder %s23, 0
      %p86 = por %p84, %p85
      %p87 = scmp.ne.s32.totalorder %s75, %s76
      %p88 = scmp.eq.s32.totalorder %s24, 1
      %p89 = por %p87, %p88
      %p91 = scmp.ne.s32.totalorder %s76, %s90
      %p92 = scmp.eq.s32.totalorder %s24, 0
      %p93 = por %p91, %p92
      %s95 = sadd.s32 %s94, 1
      %p98 = scmp.eq.s32.totalorder %s18, 1
      %p99 = scmp.ne.s32.totalorder %s94, %s96
      %p100 = scmp.eq.s32.totalorder %s18, 0
      %p101 = por %p99, %p100
      %p102 = scmp.ne.s32.totalorder %s94, %s96
      %p103 = scmp.eq.s32.totalorder %s23, 1
      %p104 = por %p102, %p103
      %p105 = scmp.ne.s32.totalorder %s96, %s97
      %p106 = scmp.eq.s32.totalorder %s23, 0
      %p107 = por %p105, %p106
      %p108 = scmp.ne.s32.totalorder %s96, %s97
      %p109 = scmp.eq.s32.totalorder %s24, 1
      %p110 = por %p108, %p109
      %p112 = scmp.ne.s32.totalorder %s97, %s111
      %p113 = scmp.eq.s32.totalorder %s24, 0
      %p114 = por %p112, %p113
      %s116 = sadd.s32 %s115, 1
      %p119 = scmp.eq.s32.totalorder %s18, 1
      %p120 = scmp.ne.s32.totalorder %s115, %s117
      %p121 = scmp.eq.s32.totalorder %s18, 0
      %p122 = por %p120, %p121
      %p123 = scmp.ne.s32.totalorder %s115, %s117
      %p124 = scmp.eq.s32.totalorder %s23, 1
      %p125 = por %p123, %p124
      %p126 = scmp.ne.s32.totalorder %s117, %s118
      %p127 = scmp.eq.s32.totalorder %s23, 0
      %p128 = por %p126, %p127
      %p129 = scmp.ne.s32.totalorder %s117, %s118
      %p130 = scmp.eq.s32.totalorder %s24, 1
      %p131 = por %p129, %p130
      %p133 = scmp.ne.s32.totalorder %s118, %s132
      %p134 = scmp.eq.s32.totalorder %s24, 0
      %p135 = por %p133, %p134
      %s136 = ssub.s32 %s18, %s25
      %p137 = scmp.eq.s32.totalorder %s136, 0
      %s139 = sadd.s32 %s138, 1
      %s140 = scalar_select %p137, %s138, %s139
      %p143 = pneg %p137
      %p144 = scmp.eq.s32.totalorder %s18, 1
      %p145 = por %p143, %p144
      %p146 = scmp.ne.s32.totalorder %s138, %s141
      %p147 = scmp.eq.s32.totalorder %s18, 0
      %p148 = por %p146, %p147
      %p149 = scmp.ne.s32.totalorder %s138, %s141
      %p150 = scmp.eq.s32.totalorder %s23, 1
      %p151 = por %p149, %p150
      %p152 = scmp.ne.s32.totalorder %s141, %s142
      %p153 = scmp.eq.s32.totalorder %s23, 0
      %p154 = por %p152, %p153
      %p155 = scmp.ne.s32.totalorder %s141, %s142
      %p156 = scmp.eq.s32.totalorder %s24, 1
      %p157 = por %p155, %p156
      %p159 = scmp.ne.s32.totalorder %s142, %s158
      %p160 = scmp.eq.s32.totalorder %s24, 0
      %p161 = por %p159, %p160
      %p162 = scmp.le.s32.totalorder 1, %s18
      %p163 = scmp.lt.s32.totalorder %s18, 3
      %p164 = pnand %p162, %p163
      %p165 = pneg %p164
      // Predicated region
      $region9: #{tpu_custom_call.1} parent=5 // pred_check
        _
      $region10: #{tpu_custom_call.1} parent=5 // pred_check_branch
        %167 = sbr.rel (%p164) target = $region12
      $region11: #{tpu_custom_call.1} parent=5 // pred_region
        %s168 = ssub.s32 %s18, 1
        // Predicated region
        $region13: #{tpu_custom_call.1} parent=11 // pred_check
          %p169 = pneg %p65
        $region14: #{tpu_custom_call.1} parent=11 // pred_check_branch
          %171 = sbr.rel (%p169) target = $region16
        $region15: #{tpu_custom_call.1} parent=11 // pred_region
          %s173 = ssub.s32 4096, 4096
          %174 = vsyncadd [#allocation6], %s173
          %s175 = sshll.u32 [#allocation5], 4
          %s176 = int_to_ptr.vmem [resolvable:$true] %s175
          %181 = dma.hbm_to_vmem [thread:$0]  %s1, 4096, %s176, [#allocation6], 256, 256, 16
        $region16: #{tpu_custom_call.1} parent=11 // pred_fallthru
          _
        // Predicated region
        $region17: #{tpu_custom_call.1} parent=11 // pred_check
          %p182 = pneg %p86
        $region18: #{tpu_custom_call.1} parent=11 // pred_check_branch
          %184 = sbr.rel (%p182) target = $region20
        $region19: #{tpu_custom_call.1} parent=11 // pred_region
          _
        $region20: #{tpu_custom_call.1} parent=11 // pred_fallthru
          _
        // Predicated region
        $region21: #{tpu_custom_call.1} parent=11 // pred_check
          %p185 = pneg %p107
        $region22: #{tpu_custom_call.1} parent=11 // pred_check_branch
          %187 = sbr.rel (%p185) target = $region24
        $region23: #{tpu_custom_call.1} parent=11 // pred_region
          %s189 = ssub.s32 4096, 4096
          %190 = vsyncadd [#allocation6], %s189
          %s191 = sshll.u32 [#allocation7], 4
          %s192 = int_to_ptr.vmem [resolvable:$true] %s191
          %197 = dma.hbm_to_vmem [thread:$0]  %s3, 4096, %s192, [#allocation6], 128, 128, 8
        $region24: #{tpu_custom_call.1} parent=11 // pred_fallthru
          _
        // Predicated region
        $region25: #{tpu_custom_call.1} parent=11 // pred_check
          %p198 = pneg %p128
        $region26: #{tpu_custom_call.1} parent=11 // pred_check_branch
          %200 = sbr.rel (%p198) target = $region28
        $region27: #{tpu_custom_call.1} parent=11 // pred_region
          _
        $region28: #{tpu_custom_call.1} parent=11 // pred_fallthru
          _
      $region12: #{tpu_custom_call.1} parent=5 // pred_fallthru
        _
      %p201 = scmp.lt.s32.totalorder %s18, 2
      // Predicated region
      $region29: #{tpu_custom_call.1} parent=5 // pred_check
        %p202 = pneg %p201
      $region30: #{tpu_custom_call.1} parent=5 // pred_check_branch
        %204 = sbr.rel (%p202) target = $region32
      $region31: #{tpu_custom_call.1} parent=5 // pred_region
        // Predicated region
        $region33: #{tpu_custom_call.1} parent=31 // pred_check
          %p205 = pneg %p38
        $region34: #{tpu_custom_call.1} parent=31 // pred_check_branch
          %207 = sbr.rel (%p205) target = $region36
        $region35: #{tpu_custom_call.1} parent=31 // pred_region
          %s208 = sand.u32 %s28, 1
          %s209 = scalar_lea.sflag [#allocation3], %s208
          %s210 = sand.u32 %s28, 1
          %s211 = smul.addr %s210, 8
          %s212 = scalar_lea.vmem [#allocation2], %s211
          %s214 = ssub.s32 128, 128
          %215 = vsyncadd %s209, %s214
          %s216 = smul.addr %s18, 128
          %s217 = scalar_lea.hbm %s0, %s216
          %s219 = sshll.u32 %s212, 4
          %s220 = int_to_ptr.vmem [resolvable:$true] %s219
          %222 = dma.hbm_to_vmem [thread:$0]  %s217, 128, %s220, %s209
        $region36: #{tpu_custom_call.1} parent=31 // pred_fallthru
          _
      $region32: #{tpu_custom_call.1} parent=5 // pred_fallthru
        _
      %p223 = scmp.le.s32.totalorder 1, %s18
      %p224 = scmp.lt.s32.totalorder %s18, 3
      %p225 = pnand %p223, %p224
      %p226 = pneg %p225
      // Predicated region
      $region37: #{tpu_custom_call.1} parent=5 // pred_check
        _
      $region38: #{tpu_custom_call.1} parent=5 // pred_check_branch
        %228 = sbr.rel (%p225) target = $region40
      $region39: #{tpu_custom_call.1} parent=5 // pred_region
        %s229 = ssub.s32 %s18, 1
        %s230 = sand.u32 %s31, 1
        %s231 = scalar_lea.sflag [#allocation3], %s230
        %s232 = sand.u32 %s31, 1
        %s233 = smul.addr %s232, 8
        %s234 = scalar_lea.vmem [#allocation2], %s233
        // Predicated region
        $region41: #{tpu_custom_call.1} parent=39 // pred_check
          %p235 = pneg %p44
        $region42: #{tpu_custom_call.1} parent=39 // pred_check_branch
          %237 = sbr.rel (%p235) target = $region44
        $region43: #{tpu_custom_call.1} parent=39 // pred_region
          %238 = dma.done %s231, 128
        $region44: #{tpu_custom_call.1} parent=39 // pred_fallthru
          _
        // Predicated region
        $region45: #{tpu_custom_call.1} parent=39 // pred_check
          %p239 = pneg %p65
        $region46: #{tpu_custom_call.1} parent=39 // pred_check_branch
          %241 = sbr.rel (%p239) target = $region48
        $region47: #{tpu_custom_call.1} parent=39 // pred_region
          %242 = dma.done [#allocation6], 4096
        $region48: #{tpu_custom_call.1} parent=39 // pred_fallthru
          _
        // Predicated region
        $region49: #{tpu_custom_call.1} parent=39 // pred_check
          %p243 = pneg %p107
        $region50: #{tpu_custom_call.1} parent=39 // pred_check_branch
          %245 = sbr.rel (%p243) target = $region52
        $region51: #{tpu_custom_call.1} parent=39 // pred_region
          %246 = dma.done [#allocation6], 4096
        $region52: #{tpu_custom_call.1} parent=39 // pred_fallthru
          _
        %s247 = sand.u32 %s31, 1
        %s248 = scalar_lea.sflag [#allocation3], %s247
        %s249 = sand.u32 %s31, 1
        %s250 = smul.addr %s249, 8
        %s251 = scalar_lea.vmem [#allocation2], %s250
        %p252 = pneg %p44
        %p253 = pneg %p41
        %p254 = pneg %p65
        %p255 = pneg %p62
        %p256 = pneg %p86
        %p257 = pneg %p83
        %p258 = pneg %p107
        %p259 = pneg %p104
        %p260 = pneg %p128
        %p261 = pneg %p125
        %p262 = pneg %p154
        %p263 = pneg %p151
        %s264 = sand.u32 %s141, 1
        %s265 = scalar_lea.sflag [#allocation4], %s264
        %s266 = sand.u32 %s141, 1
        %s267 = smul.addr %s266, 8
        %s268 = scalar_lea.vmem [#allocation8], %s267
        %v269 = vld [vmem:[%s234] sm:$0xff]
        %v270 = vld [vmem:[#allocation5] sm:$0xff]
        %v271 = vld [vmem:[#allocation5 + $0x8] sm:$0xff]
        %v272 = vld [vmem:[#allocation5 + $0x10] sm:$0xff]
        %v273 = vld [vmem:[#allocation5 + $0x18] sm:$0xff]
        %v274 = vld [vmem:[#allocation5 + $0x20] sm:$0xff]
        %v275 = vld [vmem:[#allocation5 + $0x28] sm:$0xff]
        %v276 = vld [vmem:[#allocation5 + $0x30] sm:$0xff]
        %v277 = vld [vmem:[#allocation5 + $0x38] sm:$0xff]
        %v278 = vld [vmem:[#allocation5 + $0x40] sm:$0xff]
        %v279 = vld [vmem:[#allocation5 + $0x48] sm:$0xff]
        %v280 = vld [vmem:[#allocation5 + $0x50] sm:$0xff]
        %v281 = vld [vmem:[#allocation5 + $0x58] sm:$0xff]
        %v282 = vld [vmem:[#allocation5 + $0x60] sm:$0xff]
        %v283 = vld [vmem:[#allocation5 + $0x68] sm:$0xff]
        %v284 = vld [vmem:[#allocation5 + $0x70] sm:$0xff]
        %v285 = vld [vmem:[#allocation5 + $0x78] sm:$0xff]
        %v286 = vld [vmem:[#allocation5 + $0x80] sm:$0xff]
        %v287 = vld [vmem:[#allocation5 + $0x88] sm:$0xff]
        %v288 = vld [vmem:[#allocation5 + $0x90] sm:$0xff]
        %v289 = vld [vmem:[#allocation5 + $0x98] sm:$0xff]
        %v290 = vld [vmem:[#allocation5 + $0xa0] sm:$0xff]
        %v291 = vld [vmem:[#allocation5 + $0xa8] sm:$0xff]
        %v292 = vld [vmem:[#allocation5 + $0xb0] sm:$0xff]
        %v293 = vld [vmem:[#allocation5 + $0xb8] sm:$0xff]
        %v294 = vld [vmem:[#allocation5 + $0xc0] sm:$0xff]
        %v295 = vld [vmem:[#allocation5 + $0xc8] sm:$0xff]
        %v296 = vld [vmem:[#allocation5 + $0xd0] sm:$0xff]
        %v297 = vld [vmem:[#allocation5 + $0xd8] sm:$0xff]
        %v298 = vld [vmem:[#allocation5 + $0xe0] sm:$0xff]
        %v299 = vld [vmem:[#allocation5 + $0xe8] sm:$0xff]
        %v300 = vld [vmem:[#allocation5 + $0xf0] sm:$0xff]
        %v301 = vld [vmem:[#allocation5 + $0xf8] sm:$0xff]
        %v302 = vld [vmem:[%s2] sm:$0x3]
        %v303 = vld [vmem:[#allocation7] sm:$0xff]
        %v304 = vld [vmem:[#allocation7 + $0x8] sm:$0xff]
        %v305 = vld [vmem:[#allocation7 + $0x10] sm:$0xff]
        %v306 = vld [vmem:[#allocation7 + $0x18] sm:$0xff]
        %v307 = vld [vmem:[#allocation7 + $0x20] sm:$0xff]
        %v308 = vld [vmem:[#allocation7 + $0x28] sm:$0xff]
        %v309 = vld [vmem:[#allocation7 + $0x30] sm:$0xff]
        %v310 = vld [vmem:[#allocation7 + $0x38] sm:$0xff]
        %v311 = vld [vmem:[#allocation7 + $0x40] sm:$0xff]
        %v312 = vld [vmem:[#allocation7 + $0x48] sm:$0xff]
        %v313 = vld [vmem:[#allocation7 + $0x50] sm:$0xff]
        %v314 = vld [vmem:[#allocation7 + $0x58] sm:$0xff]
        %v315 = vld [vmem:[#allocation7 + $0x60] sm:$0xff]
        %v316 = vld [vmem:[#allocation7 + $0x68] sm:$0xff]
        %v317 = vld [vmem:[#allocation7 + $0x70] sm:$0xff]
        %v318 = vld [vmem:[#allocation7 + $0x78] sm:$0xff]
        %v319 = vld [vmem:[#allocation7 + $0x80] sm:$0xff]
        %v320 = vld [vmem:[#allocation7 + $0x88] sm:$0xff]
        %v321 = vld [vmem:[#allocation7 + $0x90] sm:$0xff]
        %v322 = vld [vmem:[#allocation7 + $0x98] sm:$0xff]
        %v323 = vld [vmem:[#allocation7 + $0xa0] sm:$0xff]
        %v324 = vld [vmem:[#allocation7 + $0xa8] sm:$0xff]
        %v325 = vld [vmem:[#allocation7 + $0xb0] sm:$0xff]
        %v326 = vld [vmem:[#allocation7 + $0xb8] sm:$0xff]
        %v327 = vld [vmem:[#allocation7 + $0xc0] sm:$0xff]
        %v328 = vld [vmem:[#allocation7 + $0xc8] sm:$0xff]
        %v329 = vld [vmem:[#allocation7 + $0xd0] sm:$0xff]
        %v330 = vld [vmem:[#allocation7 + $0xd8] sm:$0xff]
        %v331 = vld [vmem:[#allocation7 + $0xe0] sm:$0xff]
        %v332 = vld [vmem:[#allocation7 + $0xe8] sm:$0xff]
        %v333 = vld [vmem:[#allocation7 + $0xf0] sm:$0xff]
        %v334 = vld [vmem:[#allocation7 + $0xf8] sm:$0xff]
        %v335 = vld [vmem:[%s4] sm:$0x1]
        %v337 = vlaneseq
        %v338 = vshrl.u32 %v337, 7
        %v339 = vsub.s32 0, %v338
        %v340 = vrot.slane %v302, %v339
        %v341 = vlaneseq
        %v342 = vshrl.u32 %v341, 7
        %v343 = vsub.s32 1, %v342
        %v344 = vrot.slane %v302, %v343
        %347 = vmatprep.subr.mxu0 %v271
        %348 = vmatpush1.msra.mxu0 %v270
        %349 = vmatprep.subr.mxu0 %v273
        %350 = vmatpush1.msra.mxu0 %v272
        %351 = vmatprep.subr.mxu0 %v275
        %352 = vmatpush1.msra.mxu0 %v274
        %353 = vmatprep.subr.mxu0 %v277
        %354 = vmatpush1.msra.mxu0 %v276
        %355 = vmatprep.subr.mxu0 %v279
        %356 = vmatpush1.msra.mxu0 %v278
        %357 = vmatprep.subr.mxu0 %v281
        %358 = vmatpush1.msra.mxu0 %v280
        %359 = vmatprep.subr.mxu0 %v283
        %360 = vmatpush1.msra.mxu0 %v282
        %361 = vmatprep.subr.mxu0 %v285
        %362 = vmatpush1.msra.mxu0 %v284
        %363 = vmatprep.subr.mxu0 %v287
        %364 = vmatpush1.msra.mxu0 %v286
        %365 = vmatprep.subr.mxu0 %v289
        %366 = vmatpush1.msra.mxu0 %v288
        %367 = vmatprep.subr.mxu0 %v291
        %368 = vmatpush1.msra.mxu0 %v290
        %369 = vmatprep.subr.mxu0 %v293
        %370 = vmatpush1.msra.mxu0 %v292
        %371 = vmatprep.subr.mxu0 %v295
        %372 = vmatpush1.msra.mxu0 %v294
        %373 = vmatprep.subr.mxu0 %v297
        %374 = vmatpush1.msra.mxu0 %v296
        %375 = vmatprep.subr.mxu0 %v299
        %376 = vmatpush1.msra.mxu0 %v298
        %377 = vmatprep.subr.mxu0 %v301
        %378 = vmatpush1.msra.mxu0 %v300
        %379 = vmatprep.subr.mxu0 0.0
        %380 = vmatpush1.msra.mxu0 0.0
        %381 = vmatprep.subr.mxu0 0.0
        %382 = vmatpush1.msra.mxu0 0.0
        %383 = vmatprep.subr.mxu0 0.0
        %384 = vmatpush1.msra.mxu0 0.0
        %385 = vmatprep.subr.mxu0 0.0
        %386 = vmatpush1.msra.mxu0 0.0
        %387 = vmatprep.subr.mxu0 0.0
        %388 = vmatpush1.msra.mxu0 0.0
        %389 = vmatprep.subr.mxu0 0.0
        %390 = vmatpush1.msra.mxu0 0.0
        %391 = vmatprep.subr.mxu0 0.0
        %392 = vmatpush1.msra.mxu0 0.0
        %393 = vmatprep.subr.mxu0 0.0
        %394 = vmatpush1.msra.mxu0 0.0
        %395 = vmatprep.subr.mxu0 0.0
        %396 = vmatpush1.msra.mxu0 0.0
        %397 = vmatprep.subr.mxu0 0.0
        %398 = vmatpush1.msra.mxu0 0.0
        %399 = vmatprep.subr.mxu0 0.0
        %400 = vmatpush1.msra.mxu0 0.0
        %401 = vmatprep.subr.mxu0 0.0
        %402 = vmatpush1.msra.mxu0 0.0
        %403 = vmatprep.subr.mxu0 0.0
        %404 = vmatpush1.msra.mxu0 0.0
        %405 = vmatprep.subr.mxu0 0.0
        %406 = vmatpush1.msra.mxu0 0.0
        %407 = vmatprep.subr.mxu0 0.0
        %408 = vmatpush1.msra.mxu0 0.0
        %409 = vmatprep.subr.mxu0 0.0
        %410 = vmatpush1.msra.mxu0 0.0
        %411 = vmatprep.mubr.f32.mxu0 0.0
        %412 = vmatmul.mubr.f32.gmra.mrb[0].mxu0 %v269
        %v413 = vpop.f32.mrb[0].mxu0
        %v414 = vadd.f32 %v340, %v413
        %v415 = vpop.f32.mrb[0].mxu0
        %v416 = vadd.f32 %v344, %v415
        %417 = vdwg.mxu0
        %v418 = vmul.f32 %v414, %v414
        %v419 = vmul.f32 %v416, %v416
        %v420 = vmul.f32 %v414, %v418
        %v421 = vmul.f32 %v416, %v419
        %v422 = vmul.f32 %v420, 0.044715
        %v423 = vmul.f32 %v421, 0.044715
        %v424 = vadd.f32 %v414, %v422
        %v425 = vadd.f32 %v416, %v423
        %v426 = vmul.f32 %v424, 0.7978846
        %v427 = vmul.f32 %v425, 0.7978846
        %v428 = vtanh.pop %v426
        %v429 = vtanh.pop %v427
        %v430 = vadd.f32 %v428, 1.0
        %v431 = vadd.f32 %v429, 1.0
        %v432 = vmul.f32 %v430, 0.5
        %v433 = vmul.f32 %v431, 0.5
        %v434 = vmul.f32 %v414, %v432
        %v435 = vmul.f32 %v416, %v433
        %v437 = vlaneseq
        %v438 = vshrl.u32 %v437, 7
        %v439 = vsub.s32 0, %v438
        %v440 = vrot.slane %v335, %v439
        %442 = vmatprep.subr.mxu0 0.0
        %443 = vmatpush1.msra.mxu0 %v303
        %444 = vmatprep.subr.mxu0 0.0
        %445 = vmatpush1.msra.mxu0 %v304
        %446 = vmatprep.subr.mxu0 0.0
        %447 = vmatpush1.msra.mxu0 %v305
        %448 = vmatprep.subr.mxu0 0.0
        %449 = vmatpush1.msra.mxu0 %v306
        %450 = vmatprep.subr.mxu0 0.0
        %451 = vmatpush1.msra.mxu0 %v307
        %452 = vmatprep.subr.mxu0 0.0
        %453 = vmatpush1.msra.mxu0 %v308
        %454 = vmatprep.subr.mxu0 0.0
        %455 = vmatpush1.msra.mxu0 %v309
        %456 = vmatprep.subr.mxu0 0.0
        %457 = vmatpush1.msra.mxu0 %v310
        %458 = vmatprep.subr.mxu0 0.0
        %459 = vmatpush1.msra.mxu0 %v311
        %460 = vmatprep.subr.mxu0 0.0
        %461 = vmatpush1.msra.mxu0 %v312
        %462 = vmatprep.subr.mxu0 0.0
        %463 = vmatpush1.msra.mxu0 %v313
        %464 = vmatprep.subr.mxu0 0.0
        %465 = vmatpush1.msra.mxu0 %v314
        %466 = vmatprep.subr.mxu0 0.0
        %467 = vmatpush1.msra.mxu0 %v315
        %468 = vmatprep.subr.mxu0 0.0
        %469 = vmatpush1.msra.mxu0 %v316
        %470 = vmatprep.subr.mxu0 0.0
        %471 = vmatpush1.msra.mxu0 %v317
        %472 = vmatprep.subr.mxu0 0.0
        %473 = vmatpush1.msra.mxu0 %v318
        %474 = vmatprep.subr.mxu0 0.0
        %475 = vmatpush1.msra.mxu0 %v319
        %476 = vmatprep.subr.mxu0 0.0
        %477 = vmatpush1.msra.mxu0 %v320
        %478 = vmatprep.subr.mxu0 0.0
        %479 = vmatpush1.msra.mxu0 %v321
        %480 = vmatprep.subr.mxu0 0.0
        %481 = vmatpush1.msra.mxu0 %v322
        %482 = vmatprep.subr.mxu0 0.0
        %483 = vmatpush1.msra.mxu0 %v323
        %484 = vmatprep.subr.mxu0 0.0
        %485 = vmatpush1.msra.mxu0 %v324
        %486 = vmatprep.subr.mxu0 0.0
        %487 = vmatpush1.msra.mxu0 %v325
        %488 = vmatprep.subr.mxu0 0.0
        %489 = vmatpush1.msra.mxu0 %v326
        %490 = vmatprep.subr.mxu0 0.0
        %491 = vmatpush1.msra.mxu0 %v327
        %492 = vmatprep.subr.mxu0 0.0
        %493 = vmatpush1.msra.mxu0 %v328
        %494 = vmatprep.subr.mxu0 0.0
        %495 = vmatpush1.msra.mxu0 %v329
        %496 = vmatprep.subr.mxu0 0.0
        %497 = vmatpush1.msra.mxu0 %v330
        %498 = vmatprep.subr.mxu0 0.0
        %499 = vmatpush1.msra.mxu0 %v331
        %500 = vmatprep.subr.mxu0 0.0
        %501 = vmatpush1.msra.mxu0 %v332
        %502 = vmatprep.subr.mxu0 0.0
        %503 = vmatpush1.msra.mxu0 %v333
        %504 = vmatprep.subr.mxu0 0.0
        %505 = vmatpush1.msra.mxu0 %v334
        %506 = vmatprep.mubr.f32.mxu0 %v435
        %507 = vmatmul.mubr.f32.gmra.mrb[0].mxu0 %v434
        %v508 = vpop.f32.mrb[0].mxu0
        %v509 = vadd.f32 %v440, %v508
        %v510 = vpop.f32.mrb[0].mxu0
        %511 = vdwg.mxu0
        %v512 = vadd.f32 %v509, %v269
        %513 = vst [vmem:[%s268] sm:$0xff] %v512
        %s514 = sand.u32 %s141, 1
        %s515 = scalar_lea.sflag [#allocation4], %s514
        %s516 = sand.u32 %s141, 1
        %s517 = smul.addr %s516, 8
        %s518 = scalar_lea.vmem [#allocation8], %s517
        // Predicated region
        $region53: #{tpu_custom_call.1} parent=39 // pred_check
          %p519 = pneg %p151
        $region54: #{tpu_custom_call.1} parent=39 // pred_check_branch
          %521 = sbr.rel (%p519) target = $region56
        $region55: #{tpu_custom_call.1} parent=39 // pred_region
          %s523 = ssub.s32 128, 128
          %524 = vsyncadd %s515, %s523
          %s525 = smul.addr %s23, 128
          %s526 = scalar_lea.hbm %s5, %s525
          %s528 = sshll.u32 %s518, 4
          %s529 = int_to_ptr.vmem [resolvable:$true] %s528
          %531 = dma.vmem_to_hbm [thread:$0]  %s529, 128, %s526, %s515
        $region56: #{tpu_custom_call.1} parent=39 // pred_fallthru
          _
      $region40: #{tpu_custom_call.1} parent=5 // pred_fallthru
        _
      %p532 = scmp.le.s32.totalorder 2, %s18
      // Predicated region
      $region57: #{tpu_custom_call.1} parent=5 // pred_check
        %p533 = pneg %p532
      $region58: #{tpu_custom_call.1} parent=5 // pred_check_branch
        %535 = sbr.rel (%p533) target = $region60
      $region59: #{tpu_custom_call.1} parent=5 // pred_region
        %s536 = ssub.s32 %s18, 2
        // Predicated region
        $region61: #{tpu_custom_call.1} parent=59 // pred_check
          %p537 = pneg %p157
        $region62: #{tpu_custom_call.1} parent=59 // pred_check_branch
          %539 = sbr.rel (%p537) target = $region64
        $region63: #{tpu_custom_call.1} parent=59 // pred_region
          %s540 = sand.u32 %s142, 1
          %s541 = scalar_lea.sflag [#allocation4], %s540
          %s542 = sand.u32 %s142, 1
          %s543 = smul.addr %s542, 8
          %s544 = scalar_lea.vmem [#allocation8], %s543
          %545 = dma.done %s541, 128
        $region64: #{tpu_custom_call.1} parent=59 // pred_fallthru
          _
      $region60: #{tpu_custom_call.1} parent=5 // pred_fallthru
        _
    $region6: #{tpu_custom_call.1} parent=1 // loop_footer
      %s22 = sadd.s32 1, %s18
    $region7: #{tpu_custom_call.1} parent=1 // loop_footer_branch
      %17 = sbr.rel target = $region3
    $region8: #{tpu_custom_call.1} parent=1 // loop_exit
      _
    %546 = vsyncpa [#allocation3], 1
    %s547 = scalar_lea.sflag [#allocation3], 1
    %548 = vsyncpa %s547, 1
    %549 = vsyncpa [#allocation6], 1
    %550 = vsyncpa [#allocation4], 1
    %s551 = scalar_lea.sflag [#allocation4], 1
    %552 = vsyncpa %s551, 1

</llo_original>
